<compile_context>
chip_gen: v5e
topology: v5e:2x2
jax: 0.10.0
libtpu: 0.0.40
codegen_flags: <defaults>
</compile_context>

<pallas_src>
import functools

import jax
import jax.numpy as jnp
from jax.experimental import pallas as pl
from jax.experimental.pallas import tpu as pltpu

BN_EPS = 1e-5  # PyTorch F.batch_norm default eps


def _round_up(x, m):
    return -(-x // m) * m


def _chip_params():
    """Per-generation (vmem_cap_bytes, vpu_cutoff_channels)."""
    vmem_bytes = 64 << 20  # conservative default = v7x per-TC VMEM
    try:
        info = pltpu.get_tpu_info()
        vmem_bytes = int(getattr(info, "vmem_capacity_bytes", vmem_bytes))
    except Exception:
        pass
    if vmem_bytes <= (64 << 20):
        # v7x: 64 MiB VMEM, ~3.2 TB/s HBM -> smaller cap, lower VPU cutoff
        # (at C=8 the broadcast-FMA path flips the kernel to VALU-bound).
        return 40 << 20, 4
    # v5e / v6e: 128 MiB VMEM, slower HBM -> larger cap, VPU path good to C~8.
    return 80 << 20, 8


def _choose_tiling(N, C, HW, itemsize, block_budget):
    """Pick (nb images/step, spatial tile t) so each step carries multi-MiB
    double-buffered blocks while keeping >=~8 grid steps when possible."""
    sub = max(8, 32 // itemsize)            # sublane multiple for this dtype
    c_pad = _round_up(C, sub)               # padded channels of the x block
    c2_pad = _round_up(2 * C, sub)          # padded channels of the out block
    bytes_per_lane = (c_pad + c2_pad) * itemsize  # per lane column, per buffer

    # Lanes per step so that double-buffered (x + out) blocks fit the budget.
    max_lanes = max(block_budget // (2 * bytes_per_lane), 128)

    if HW >= max_lanes:
        # Large spatial extent: one image per step, lane-aligned spatial chunks.
        nb = 1
        t = max((max_lanes // 128) * 128, 128)
        if t >= HW:
            t = HW
    else:
        # Small spatial extent: keep full HW per image, batch images per step.
        t = HW
        nb = int(max(1, min(N, max_lanes // max(HW, 1))))

    # Grid anti-collapse (megacore sharding + pipeline overlap): expose >=8
    # steps when we can do so without dropping below ~1 MiB per step.
    def steps(nb_, t_):
        return _round_up(N, nb_) // nb_ * (_round_up(HW, t_) // t_)

    min_payload_lanes = max((1 << 20) // bytes_per_lane, 128)
    while nb > 1 and steps(nb, t) < 8 and (nb // 2) * t >= min_payload_lanes:
        nb = max(1, nb // 2)
    while t % 256 == 0 and steps(nb, t) < 8 and nb * (t // 2) >= min_payload_lanes:
        t //= 2

    return nb, t, c_pad, c2_pad


def _channel_matmul(w, h, cutoff):
    """(Co, Ci) x (..., Ci, T) -> (..., Co, T).

    For tiny channel counts the contraction is Ci broadcast-FMAs on the VPU
    (a 128/256-wide MXU would be ~100% idle); larger C uses the MXU with f32
    accumulation (batched matmul when a leading image-batch dim is present).
    """
    ci = w.shape[1]
    if ci <= cutoff:
        if h.ndim == 2:
            acc = w[:, 0:1] * h[0:1, :]
            for c in range(1, ci):
                acc = acc + w[:, c:c + 1] * h[c:c + 1, :]
        else:
            acc = w[None, :, 0:1] * h[:, 0:1, :]
            for c in range(1, ci):
                acc = acc + w[None, :, c:c + 1] * h[:, c:c + 1, :]
        return acc
    if h.ndim == 2:
        return jnp.dot(w, h, preferred_element_type=jnp.float32)
    wb = jnp.broadcast_to(w[None], (h.shape[0],) + w.shape)
    return jnp.einsum("noc,nct->not", wb, h, preferred_element_type=jnp.float32)


def dense_layer_kernel(x_ref, w1_ref, w2_ref, o_ref, *, cutoff):
    """Fused relu -> 1x1conv -> relu -> 1x1conv -> concat on one block.

    x_ref  : (C, T) or (nb, C, T) tile in the input dtype (spatial on lanes)
    w1_ref : (C, C) f32 weights with the first BN scale folded in
    w2_ref : (C, C) f32 weights with the second BN scale folded in
    o_ref  : (2C, T) or (nb, 2C, T): rows [0, C) = pass-through x,
                                     rows [C, 2C) = new features
    """
    C = x_ref.shape[-2]
    x = x_ref[...]
    h = jnp.maximum(x.astype(jnp.float32), 0.0)      # bn scale folded into w1
    h = _channel_matmul(w1_ref[...], h, cutoff)       # 1x1 conv #1
    h = jnp.maximum(h, 0.0)                           # bn scale folded into w2
    y = _channel_matmul(w2_ref[...], h, cutoff)       # 1x1 conv #2 (+ identity dropout)

    # Fused concat([x, new_features], channel dim): sublane-sliced stores into
    # the same lane-dense output block.
    if x_ref.ndim == 2:
        o_ref[0:C, :] = x.astype(o_ref.dtype)
        o_ref[C:, :] = y.astype(o_ref.dtype)
    else:
        o_ref[:, 0:C, :] = x.astype(o_ref.dtype)
        o_ref[:, C:, :] = y.astype(o_ref.dtype)


def dense_layer_forward(x, w1, w2):
    """x: (N, C, H, W); w1, w2: (C, C, 1, 1). Returns (N, 2C, H, W)."""
    N, C, H, W = x.shape
    HW = H * W
    in_dtype = x.dtype
    itemsize = jnp.dtype(in_dtype).itemsize

    # Fold both bn(mean=0, var=0, eps) scales into the f32 weights:
    #   relu(s*x) = s*relu(x)  (s > 0)  =>  y = (s*W2) @ relu((s*W1) @ relu(x))
    inv_std = 1.0 / (BN_EPS ** 0.5)
    w1s = w1.reshape(C, C).astype(jnp.float32) * jnp.float32(inv_std)
    w2s = w2.reshape(C, C).astype(jnp.float32) * jnp.float32(inv_std)

    # Lane-dense view: spatial axis last (no NCHW<->NHWC transpose anywhere).
    x3 = x.reshape(N, C, HW)

    # Per-generation VMEM cap and VPU/MXU cutoff; tiles sized from the budget.
    vmem_cap, cutoff = _chip_params()
    block_budget = int(vmem_cap * 0.75)   # headroom for weights / compiler scratch
    nb, t, c_pad, c2_pad = _choose_tiling(N, C, HW, itemsize, block_budget)

    grid = (pl.cdiv(N, nb), pl.cdiv(HW, t))

    # Explicit VMEM limit from the *padded* footprint, capped per generation.
    t_pad = _round_up(t, 128)
    block_bytes = nb * (c_pad + c2_pad) * t_pad * itemsize           # x + out, 1 buf each
    w_bytes = _round_up(C, 8) * _round_up(C, 128) * 4                # one padded f32 weight
    footprint = 2 * block_bytes + 2 * 2 * w_bytes                    # double-buffered
    vmem_limit = int(min(vmem_cap, max(8 << 20, int(footprint * 1.3))))

    kernel = functools.partial(dense_layer_kernel, cutoff=cutoff)

    if nb == 1:
        in_x_spec = pl.BlockSpec((None, C, t), lambda n, s: (n, 0, s))
        out_spec = pl.BlockSpec((None, 2 * C, t), lambda n, s: (n, 0, s))
    else:
        in_x_spec = pl.BlockSpec((nb, C, t), lambda n, s: (n, 0, s))
        out_spec = pl.BlockSpec((nb, 2 * C, t), lambda n, s: (n, 0, s))

    out3 = pl.pallas_call(
        kernel,
        out_shape=jax.ShapeDtypeStruct((N, 2 * C, HW), in_dtype),
        grid_spec=pltpu.PrefetchScalarGridSpec(
            num_scalar_prefetch=0,
            grid=grid,
            in_specs=[
                in_x_spec,
                pl.BlockSpec((C, C), lambda n, s: (0, 0)),
                pl.BlockSpec((C, C), lambda n, s: (0, 0)),
            ],
            out_specs=out_spec,
        ),
        compiler_params=pltpu.CompilerParams(
            dimension_semantics=("parallel", "parallel"),
            vmem_limit_bytes=vmem_limit,
        ),
    )(x3, w1s, w2s)

    return out3.reshape(N, 2 * C, H, W)


def _reference(x, w1, w2):
    """Plain-JAX reference mirroring the PyTorch module step by step."""
    inv_std = 1.0 / jnp.sqrt(jnp.float32(BN_EPS))
    N, C, H, W = x.shape
    h = jnp.maximum(x.astype(jnp.float32) * inv_std, 0.0)
    h = jnp.einsum("nchw,oc->nohw", h, w1.reshape(C, C).astype(jnp.float32))
    h = jnp.maximum(h * inv_std, 0.0)
    h = jnp.einsum("nchw,oc->nohw", h, w2.reshape(C, C).astype(jnp.float32))
    return jnp.concatenate([x, h.astype(x.dtype)], axis=1)


if __name__ == "__main__":
    key = jax.random.PRNGKey(0)
    kx, kw1, kw2 = jax.random.split(key, 3)

    N, C, H, W = 2, 4, 16, 16
    x = jax.random.normal(kx, (N, C, H, W), dtype=jnp.float32)
    # deterministic stand-ins for torch.randn(C, C, 1, 1).float() weights
    w1 = jax.random.normal(kw1, (C, C, 1, 1), dtype=jnp.float32)
    w2 = jax.random.normal(kw2, (C, C, 1, 1), dtype=jnp.float32)

    out = dense_layer_forward(x, w1, w2)
    out = jax.block_until_ready(out)

    ref = _reference(x, w1, w2)
    assert out.shape == (N, 2 * C, H, W), out.shape
    # values are ~1e5 in magnitude (1/sqrt(eps) applied twice), so rtol dominates
    assert jnp.allclose(out, ref, rtol=1e-4, atol=1e-2), "mismatch vs reference"

    print("KERNEL_OK")
</pallas_src>

<mosaic_0001>
module attributes {stable_mosaic.version = 11 : i64} {
  func.func @dense_layer_kernel(%arg0: i32, %arg1: i32, %arg2: memref<2x4x256xf32, #tpu.memory_space<vmem>>, %arg3: memref<4x4xf32, #tpu.memory_space<vmem>>, %arg4: memref<4x4xf32, #tpu.memory_space<vmem>>, %arg5: memref<2x8x256xf32, #tpu.memory_space<vmem>>) attributes {dimension_semantics = [#tpu.dimension_semantics<parallel>, #tpu.dimension_semantics<parallel>], iteration_bounds = array<i64: 1, 1>, scalar_prefetch = 0 : i64, scratch_operands = 0 : i64, tpu.core_type = #tpu.core_type<tc>, window_params = [{transform_indices = @transform_0, window_bounds = array<i64: 2, 4, 256>}, {pipeline_mode = #tpu.pipeline_mode<synchronous>, transform_indices = @transform_1, window_bounds = array<i64: 4, 4>}, {pipeline_mode = #tpu.pipeline_mode<synchronous>, transform_indices = @transform_2, window_bounds = array<i64: 4, 4>}, {transform_indices = @transform_3, window_bounds = array<i64: 2, 8, 256>}]} {
    %c0 = arith.constant 0 : index
    %c0_0 = arith.constant 0 : index
    %c0_1 = arith.constant 0 : index
    %0 = vector.load %arg2[%c0, %c0_0, %c0_1] : memref<2x4x256xf32, #tpu.memory_space<vmem>>, vector<2x4x256xf32>
    %cst = arith.constant 0.000000e+00 : f32
    %1 = vector.broadcast %cst : f32 to vector<2x4x256xf32>
    %2 = arith.maximumf %0, %1 : vector<2x4x256xf32>
    %c0_2 = arith.constant 0 : index
    %c0_3 = arith.constant 0 : index
    %3 = vector.load %arg3[%c0_2, %c0_3] : memref<4x4xf32, #tpu.memory_space<vmem>>, vector<4x4xf32>
    %4 = vector.extract_strided_slice %3 {offsets = [0, 0], sizes = [4, 1], strides = [1, 1]} : vector<4x4xf32> to vector<4x1xf32>
    %5 = vector.shape_cast %4 : vector<4x1xf32> to vector<1x4x1xf32>
    %6 = vector.extract_strided_slice %2 {offsets = [0, 0, 0], sizes = [2, 1, 256], strides = [1, 1, 1]} : vector<2x4x256xf32> to vector<2x1x256xf32>
    %7 = vector.broadcast %5 : vector<1x4x1xf32> to vector<2x4x256xf32>
    %8 = vector.broadcast %6 : vector<2x1x256xf32> to vector<2x4x256xf32>
    %9 = arith.mulf %7, %8 : vector<2x4x256xf32>
    %10 = vector.extract_strided_slice %3 {offsets = [0, 1], sizes = [4, 1], strides = [1, 1]} : vector<4x4xf32> to vector<4x1xf32>
    %11 = vector.shape_cast %10 : vector<4x1xf32> to vector<1x4x1xf32>
    %12 = vector.extract_strided_slice %2 {offsets = [0, 1, 0], sizes = [2, 1, 256], strides = [1, 1, 1]} : vector<2x4x256xf32> to vector<2x1x256xf32>
    %13 = vector.broadcast %11 : vector<1x4x1xf32> to vector<2x4x256xf32>
    %14 = vector.broadcast %12 : vector<2x1x256xf32> to vector<2x4x256xf32>
    %15 = arith.mulf %13, %14 : vector<2x4x256xf32>
    %16 = arith.addf %9, %15 : vector<2x4x256xf32>
    %17 = vector.extract_strided_slice %3 {offsets = [0, 2], sizes = [4, 1], strides = [1, 1]} : vector<4x4xf32> to vector<4x1xf32>
    %18 = vector.shape_cast %17 : vector<4x1xf32> to vector<1x4x1xf32>
    %19 = vector.extract_strided_slice %2 {offsets = [0, 2, 0], sizes = [2, 1, 256], strides = [1, 1, 1]} : vector<2x4x256xf32> to vector<2x1x256xf32>
    %20 = vector.broadcast %18 : vector<1x4x1xf32> to vector<2x4x256xf32>
    %21 = vector.broadcast %19 : vector<2x1x256xf32> to vector<2x4x256xf32>
    %22 = arith.mulf %20, %21 : vector<2x4x256xf32>
    %23 = arith.addf %16, %22 : vector<2x4x256xf32>
    %24 = vector.extract_strided_slice %3 {offsets = [0, 3], sizes = [4, 1], strides = [1, 1]} : vector<4x4xf32> to vector<4x1xf32>
    %25 = vector.shape_cast %24 : vector<4x1xf32> to vector<1x4x1xf32>
    %26 = vector.extract_strided_slice %2 {offsets = [0, 3, 0], sizes = [2, 1, 256], strides = [1, 1, 1]} : vector<2x4x256xf32> to vector<2x1x256xf32>
    %27 = vector.broadcast %25 : vector<1x4x1xf32> to vector<2x4x256xf32>
    %28 = vector.broadcast %26 : vector<2x1x256xf32> to vector<2x4x256xf32>
    %29 = arith.mulf %27, %28 : vector<2x4x256xf32>
    %30 = arith.addf %23, %29 : vector<2x4x256xf32>
    %cst_4 = arith.constant 0.000000e+00 : f32
    %31 = vector.broadcast %cst_4 : f32 to vector<2x4x256xf32>
    %32 = arith.maximumf %30, %31 : vector<2x4x256xf32>
    %c0_5 = arith.constant 0 : index
    %c0_6 = arith.constant 0 : index
    %33 = vector.load %arg4[%c0_5, %c0_6] : memref<4x4xf32, #tpu.memory_space<vmem>>, vector<4x4xf32>
    %34 = vector.extract_strided_slice %33 {offsets = [0, 0], sizes = [4, 1], strides = [1, 1]} : vector<4x4xf32> to vector<4x1xf32>
    %35 = vector.shape_cast %34 : vector<4x1xf32> to vector<1x4x1xf32>
    %36 = vector.extract_strided_slice %32 {offsets = [0, 0, 0], sizes = [2, 1, 256], strides = [1, 1, 1]} : vector<2x4x256xf32> to vector<2x1x256xf32>
    %37 = vector.broadcast %35 : vector<1x4x1xf32> to vector<2x4x256xf32>
    %38 = vector.broadcast %36 : vector<2x1x256xf32> to vector<2x4x256xf32>
    %39 = arith.mulf %37, %38 : vector<2x4x256xf32>
    %40 = vector.extract_strided_slice %33 {offsets = [0, 1], sizes = [4, 1], strides = [1, 1]} : vector<4x4xf32> to vector<4x1xf32>
    %41 = vector.shape_cast %40 : vector<4x1xf32> to vector<1x4x1xf32>
    %42 = vector.extract_strided_slice %32 {offsets = [0, 1, 0], sizes = [2, 1, 256], strides = [1, 1, 1]} : vector<2x4x256xf32> to vector<2x1x256xf32>
    %43 = vector.broadcast %41 : vector<1x4x1xf32> to vector<2x4x256xf32>
    %44 = vector.broadcast %42 : vector<2x1x256xf32> to vector<2x4x256xf32>
    %45 = arith.mulf %43, %44 : vector<2x4x256xf32>
    %46 = arith.addf %39, %45 : vector<2x4x256xf32>
    %47 = vector.extract_strided_slice %33 {offsets = [0, 2], sizes = [4, 1], strides = [1, 1]} : vector<4x4xf32> to vector<4x1xf32>
    %48 = vector.shape_cast %47 : vector<4x1xf32> to vector<1x4x1xf32>
    %49 = vector.extract_strided_slice %32 {offsets = [0, 2, 0], sizes = [2, 1, 256], strides = [1, 1, 1]} : vector<2x4x256xf32> to vector<2x1x256xf32>
    %50 = vector.broadcast %48 : vector<1x4x1xf32> to vector<2x4x256xf32>
    %51 = vector.broadcast %49 : vector<2x1x256xf32> to vector<2x4x256xf32>
    %52 = arith.mulf %50, %51 : vector<2x4x256xf32>
    %53 = arith.addf %46, %52 : vector<2x4x256xf32>
    %54 = vector.extract_strided_slice %33 {offsets = [0, 3], sizes = [4, 1], strides = [1, 1]} : vector<4x4xf32> to vector<4x1xf32>
    %55 = vector.shape_cast %54 : vector<4x1xf32> to vector<1x4x1xf32>
    %56 = vector.extract_strided_slice %32 {offsets = [0, 3, 0], sizes = [2, 1, 256], strides = [1, 1, 1]} : vector<2x4x256xf32> to vector<2x1x256xf32>
    %57 = vector.broadcast %55 : vector<1x4x1xf32> to vector<2x4x256xf32>
    %58 = vector.broadcast %56 : vector<2x1x256xf32> to vector<2x4x256xf32>
    %59 = arith.mulf %57, %58 : vector<2x4x256xf32>
    %60 = arith.addf %53, %59 : vector<2x4x256xf32>
    %c0_7 = arith.constant 0 : index
    %c0_8 = arith.constant 0 : index
    %c0_9 = arith.constant 0 : index
    %61 = vector.load %arg5[%c0_7, %c0_8, %c0_9] : memref<2x8x256xf32, #tpu.memory_space<vmem>>, vector<2x4x256xf32>
    tpu.vector_store %arg5[%c0_7, %c0_8, %c0_9], %0 {strides = array<i32>} : memref<2x8x256xf32, #tpu.memory_space<vmem>>, vector<2x4x256xf32>,
    %c0_10 = arith.constant 0 : index
    %c4 = arith.constant 4 : index
    %c0_11 = arith.constant 0 : index
    %62 = vector.load %arg5[%c0_10, %c4, %c0_11] : memref<2x8x256xf32, #tpu.memory_space<vmem>>, vector<2x4x256xf32>
    tpu.vector_store %arg5[%c0_10, %c4, %c0_11], %60 {strides = array<i32>} : memref<2x8x256xf32, #tpu.memory_space<vmem>>, vector<2x4x256xf32>,
    return
  }
  func.func @transform_0(%arg0: i32, %arg1: i32) -> (i32, i32, i32) {
    %c0_i32 = arith.constant 0 : i32
    %c0_i32_0 = arith.constant 0 : i32
    return %arg0, %c0_i32, %arg1 : i32, i32, i32
  }
  func.func @transform_1(%arg0: i32, %arg1: i32) -> (i32, i32) {
    %c0_i32 = arith.constant 0 : i32
    %c0_i32_0 = arith.constant 0 : i32
    %c0_i32_1 = arith.constant 0 : i32
    return %c0_i32, %c0_i32_0 : i32, i32
  }
  func.func @transform_2(%arg0: i32, %arg1: i32) -> (i32, i32) {
    %c0_i32 = arith.constant 0 : i32
    %c0_i32_0 = arith.constant 0 : i32
    %c0_i32_1 = arith.constant 0 : i32
    return %c0_i32, %c0_i32_0 : i32, i32
  }
  func.func @transform_3(%arg0: i32, %arg1: i32) -> (i32, i32, i32) {
    %c0_i32 = arith.constant 0 : i32
    %c0_i32_0 = arith.constant 0 : i32
    return %arg0, %c0_i32, %arg1 : i32, i32, i32
  }
}

</mosaic_0001>

<llo_original>
// kernel: tpu_custom_call.1
$region0: #{tpu_custom_call.1}
  #allocation0 [shape = 'u32[]', space=smem, size = 0x4, offset = 0x4, fixed_abs, tag = 'smem constant byte address 0x4 - core index']
  #allocation1 [shape = 'u32[72,128]{1,0:T(1,128)}', space=vmem, size = 0x9000, scoped, tag = 'internal scratch']
  %s0 = inlined_call_operand.hbm [shape: f32[2,4,256], index: 0, kind: input, shape index: {}]
  %s1 = inlined_call_operand.hbm [shape: f32[4,4], index: 1, kind: input, shape index: {}]
  %s2 = inlined_call_operand.hbm [shape: f32[4,4], index: 2, kind: input, shape index: {}]
  %s3 = inlined_call_operand.hbm [shape: f32[2,8,256], index: 3, kind: output, shape index: {}]
  %s4 = sld [smem:[#allocation0]]
  $region34: #{tpu_custom_call.1} parent=0
    _
  %s6 = ssub.s32 1, %s4
  %s7 = scalar_select 0, %s6, %s4
  $region1: #{tpu_custom_call.1} parent=0
    #allocation2 [shape = 'u8[8192]{0}', space=vmem, size = 0x2000, scoped, tag = 'input window, operand 0, single buffered']
    #allocation3 [shape = 's32[1]{0}', space=sflag, size = 0x4, scoped, tag = 'scoped memory for tpu_custom_call.1']
    #allocation4 [shape = 's32[1]{0}', space=sflag, size = 0x4, scoped, tag = 'scoped memory for tpu_custom_call.1']
    #allocation5 [shape = 'u8[2048]{0}', space=vmem, size = 0x800, scoped, tag = 'input window, operand 1, single buffered']
    #allocation6 [shape = 's32[1]{0}', space=sflag, size = 0x4, scoped, tag = 'scoped memory for tpu_custom_call.1']
    #allocation7 [shape = 'u8[2048]{0}', space=vmem, size = 0x800, scoped, tag = 'input window, operand 2, single buffered']
    #allocation8 [shape = 'u8[16384]{0}', space=vmem, size = 0x4000, scoped, tag = 'output window, operand 0, single buffered']
    %8 = vsyncpa [#allocation3], 0
    %9 = vsyncpa [#allocation6], 0
    %10 = vsyncpa [#allocation4], 0
    // Predicated region
    $region2: #{tpu_custom_call.1} parent=1 // pred_check
      _
    $region3: #{tpu_custom_call.1} parent=1 // pred_check_branch
      %12 = sbr.rel (0) target = $region5
    $region4: #{tpu_custom_call.1} parent=1 // pred_region
      %14 = vsyncadd [#allocation3], 0
      %s15 = sshll.u32 %s0, 4
      %s16 = int_to_ptr.hbm [resolvable:$true] %s15
      %s17 = sshll.u32 [#allocation2], 4
      %s18 = int_to_ptr.vmem [resolvable:$true] %s17
      %23 = dma.hbm_to_vmem [thread:$0]  %s16, 256, %s18, [#allocation3], 128, 128, 8
    $region5: #{tpu_custom_call.1} parent=1 // pred_fallthru
      _
    // Predicated region
    $region6: #{tpu_custom_call.1} parent=1 // pred_check
      _
    $region7: #{tpu_custom_call.1} parent=1 // pred_check_branch
      %25 = sbr.rel (0) target = $region9
    $region8: #{tpu_custom_call.1} parent=1 // pred_region
      %27 = vsyncadd [#allocation6], 0
      %s29 = sshll.u32 %s1, 4
      %s30 = int_to_ptr.hbm [resolvable:$true] %s29
      %s31 = sshll.u32 [#allocation5], 4
      %s32 = int_to_ptr.vmem [resolvable:$true] %s31
      %34 = dma.hbm_to_vmem [thread:$0]  %s30, 64, %s32, [#allocation6]
    $region9: #{tpu_custom_call.1} parent=1 // pred_fallthru
      _
    // Predicated region
    $region10: #{tpu_custom_call.1} parent=1 // pred_check
      _
    $region11: #{tpu_custom_call.1} parent=1 // pred_check_branch
      %36 = sbr.rel (0) target = $region13
    $region12: #{tpu_custom_call.1} parent=1 // pred_region
      %38 = vsyncadd [#allocation6], 0
      %s40 = sshll.u32 %s2, 4
      %s41 = int_to_ptr.hbm [resolvable:$true] %s40
      %s42 = sshll.u32 [#allocation7], 4
      %s43 = int_to_ptr.vmem [resolvable:$true] %s42
      %45 = dma.hbm_to_vmem [thread:$0]  %s41, 64, %s43, [#allocation6]
    $region13: #{tpu_custom_call.1} parent=1 // pred_fallthru
      _
    // Predicated region
    $region14: #{tpu_custom_call.1} parent=1 // pred_check
      _
    $region15: #{tpu_custom_call.1} parent=1 // pred_check_branch
      %47 = sbr.rel (0) target = $region17
    $region16: #{tpu_custom_call.1} parent=1 // pred_region
      %49 = dma.done [#allocation3], 256
    $region17: #{tpu_custom_call.1} parent=1 // pred_fallthru
      _
    // Predicated region
    $region18: #{tpu_custom_call.1} parent=1 // pred_check
      _
    $region19: #{tpu_custom_call.1} parent=1 // pred_check_branch
      %51 = sbr.rel (0) target = $region21
    $region20: #{tpu_custom_call.1} parent=1 // pred_region
      %53 = dma.done [#allocation6], 64
    $region21: #{tpu_custom_call.1} parent=1 // pred_fallthru
      _
    // Predicated region
    $region22: #{tpu_custom_call.1} parent=1 // pred_check
      _
    $region23: #{tpu_custom_call.1} parent=1 // pred_check_branch
      %55 = sbr.rel (0) target = $region25
    $region24: #{tpu_custom_call.1} parent=1 // pred_region
      %57 = dma.done [#allocation6], 64
    $region25: #{tpu_custom_call.1} parent=1 // pred_fallthru
      _
    %v58 = vld [vmem:[#allocation2] sm:$0xff]
    %v59 = vld [vmem:[#allocation2 + $0x8] sm:$0xff]
    %v60 = vmax.f32 %v58, 0.0
    %v61 = vmax.f32 %v59, 0.0
    %v62 = vld [vmem:[#allocation5] sm:$0xf]
    %64 = vset.pattern.permute.xlu0 0
    %65 = vperm.xlu0 %64, %v62
    %v66 = vpop.permute.xlu0 %65
    %v70 = vperm.slane %v60, 0
    %v71 = vperm.slane %v60, 4
    %v72 = vperm.slane %v61, 0
    %v73 = vperm.slane %v61, 4
    %v78 = vperm.slane %v70, 0
    %v79 = vperm.slane %v71, 0
    %v80 = vperm.slane %v72, 0
    %v81 = vperm.slane %v73, 0
    %v82 = vmul.f32 %v66, %v78
    %v83 = vmul.f32 %v66, %v79
    %v84 = vmul.f32 %v66, %v80
    %v85 = vmul.f32 %v66, %v81
    %86 = vset.pattern.permute.xlu0 1
    %87 = vperm.xlu0 %86, %v62
    %v88 = vpop.permute.xlu0 %87
    %v90 = vperm.slane %v60, 1
    %v91 = vperm.slane %v60, 5
    %v92 = vperm.slane %v61, 1
    %v93 = vperm.slane %v61, 5
    %v98 = vperm.slane %v90, 1
    %v99 = vperm.slane %v91, 1
    %v100 = vperm.slane %v92, 1
    %v101 = vperm.slane %v93, 1
    %v102 = vmul.f32 %v88, %v98
    %v103 = vmul.f32 %v88, %v99
    %v104 = vmul.f32 %v88, %v100
    %v105 = vmul.f32 %v88, %v101
    %v106 = vadd.f32 %v82, %v102
    %v107 = vadd.f32 %v83, %v103
    %v108 = vadd.f32 %v84, %v104
    %v109 = vadd.f32 %v85, %v105
    %110 = vset.pattern.permute.xlu0 2
    %111 = vperm.xlu0 %110, %v62
    %v112 = vpop.permute.xlu0 %111
    %v114 = vperm.slane %v60, 2
    %v115 = vperm.slane %v60, 6
    %v116 = vperm.slane %v61, 2
    %v117 = vperm.slane %v61, 6
    %v122 = vperm.slane %v114, 2
    %v123 = vperm.slane %v115, 2
    %v124 = vperm.slane %v116, 2
    %v125 = vperm.slane %v117, 2
    %v126 = vmul.f32 %v112, %v122
    %v127 = vmul.f32 %v112, %v123
    %v128 = vmul.f32 %v112, %v124
    %v129 = vmul.f32 %v112, %v125
    %v130 = vadd.f32 %v106, %v126
    %v131 = vadd.f32 %v107, %v127
    %v132 = vadd.f32 %v108, %v128
    %v133 = vadd.f32 %v109, %v129
    %134 = vset.pattern.permute.xlu0 3
    %135 = vperm.xlu0 %134, %v62
    %v136 = vpop.permute.xlu0 %135
    %v138 = vperm.slane %v60, 3
    %v139 = vperm.slane %v60, 7
    %v140 = vperm.slane %v61, 3
    %v141 = vperm.slane %v61, 7
    %v146 = vperm.slane %v138, 3
    %v147 = vperm.slane %v139, 3
    %v148 = vperm.slane %v140, 3
    %v149 = vperm.slane %v141, 3
    %v150 = vmul.f32 %v136, %v146
    %v151 = vmul.f32 %v136, %v147
    %v152 = vmul.f32 %v136, %v148
    %v153 = vmul.f32 %v136, %v149
    %v154 = vadd.f32 %v130, %v150
    %v155 = vadd.f32 %v131, %v151
    %v156 = vadd.f32 %v132, %v152
    %v157 = vadd.f32 %v133, %v153
    %v158 = vmax.f32 %v154, 0.0
    %v159 = vmax.f32 %v155, 0.0
    %v160 = vmax.f32 %v156, 0.0
    %v161 = vmax.f32 %v157, 0.0
    %v162 = vld [vmem:[#allocation7] sm:$0xf]
    %164 = vset.pattern.permute.xlu0 0
    %165 = vperm.xlu0 %164, %v162
    %v166 = vpop.permute.xlu0 %165
    %v168 = vperm.slane %v158, 0
    %v169 = vperm.slane %v159, 0
    %v170 = vperm.slane %v160, 0
    %v171 = vperm.slane %v161, 0
    %v172 = vmul.f32 %v166, %v168
    %v173 = vmul.f32 %v166, %v169
    %v174 = vmul.f32 %v166, %v170
    %v175 = vmul.f32 %v166, %v171
    %176 = vset.pattern.permute.xlu0 1
    %177 = vperm.xlu0 %176, %v162
    %v178 = vpop.permute.xlu0 %177
    %v180 = vperm.slane %v158, 1
    %v181 = vperm.slane %v159, 1
    %v182 = vperm.slane %v160, 1
    %v183 = vperm.slane %v161, 1
    %v184 = vmul.f32 %v178, %v180
    %v185 = vmul.f32 %v178, %v181
    %v186 = vmul.f32 %v178, %v182
    %v187 = vmul.f32 %v178, %v183
    %v188 = vadd.f32 %v172, %v184
    %v189 = vadd.f32 %v173, %v185
    %v190 = vadd.f32 %v174, %v186
    %v191 = vadd.f32 %v175, %v187
    %192 = vset.pattern.permute.xlu0 2
    %193 = vperm.xlu0 %192, %v162
    %v194 = vpop.permute.xlu0 %193
    %v196 = vperm.slane %v158, 2
    %v197 = vperm.slane %v159, 2
    %v198 = vperm.slane %v160, 2
    %v199 = vperm.slane %v161, 2
    %v200 = vmul.f32 %v194, %v196
    %v201 = vmul.f32 %v194, %v197
    %v202 = vmul.f32 %v194, %v198
    %v203 = vmul.f32 %v194, %v199
    %v204 = vadd.f32 %v188, %v200
    %v205 = vadd.f32 %v189, %v201
    %v206 = vadd.f32 %v190, %v202
    %v207 = vadd.f32 %v191, %v203
    %208 = vset.pattern.permute.xlu0 3
    %209 = vperm.xlu0 %208, %v162
    %v210 = vpop.permute.xlu0 %209
    %v212 = vperm.slane %v158, 3
    %v213 = vperm.slane %v159, 3
    %v214 = vperm.slane %v160, 3
    %v215 = vperm.slane %v161, 3
    %v216 = vmul.f32 %v210, %v212
    %v217 = vmul.f32 %v210, %v213
    %v218 = vmul.f32 %v210, %v214
    %v219 = vmul.f32 %v210, %v215
    %v220 = vadd.f32 %v204, %v216
    %v221 = vadd.f32 %v205, %v217
    %v222 = vadd.f32 %v206, %v218
    %v223 = vadd.f32 %v207, %v219
    %226 = vst [vmem:[#allocation1] ss:$2 sm:$0xff] %v58
    %v227 = vld.sshfl [vmem:[#allocation1] sm:$0xff pattern:$0x75316420]
    %v228 = vld.sshfl [vmem:[#allocation1 + $0x8] sm:$0xff pattern:$0x75316420]
    %s229 = scalar_lea.vmem [#allocation1], 16
    %230 = vst [vmem:[%s229] ss:$2 sm:$0xff] %v59
    %v231 = vld.sshfl [vmem:[#allocation1 + $0x10] sm:$0xff pattern:$0x75316420]
    %v232 = vld.sshfl [vmem:[#allocation1 + $0x18] sm:$0xff pattern:$0x75316420]
    %237 = vst [vmem:[#allocation8] sm:$0xf] %v227
    %238 = vst [vmem:[#allocation8 + $0x8] sm:$0xf] %v228
    %239 = vst [vmem:[#allocation8 + $0x10] sm:$0xf] %v231
    %240 = vst [vmem:[#allocation8 + $0x18] sm:$0xf] %v232
    %v245 = vrot.slane %v220, 4
    %v246 = vrot.slane %v221, 4
    %v247 = vrot.slane %v222, 4
    %v248 = vrot.slane %v223, 4
    %253 = vst [vmem:[#allocation8] sm:$0xf0] %v245
    %254 = vst [vmem:[#allocation8 + $0x8] sm:$0xf0] %v246
    %255 = vst [vmem:[#allocation8 + $0x10] sm:$0xf0] %v247
    %256 = vst [vmem:[#allocation8 + $0x18] sm:$0xf0] %v248
    // Predicated region
    $region26: #{tpu_custom_call.1} parent=1 // pred_check
      _
    $region27: #{tpu_custom_call.1} parent=1 // pred_check_branch
      %258 = sbr.rel (0) target = $region29
    $region28: #{tpu_custom_call.1} parent=1 // pred_region
      %260 = vsyncadd [#allocation4], 0
      %s261 = sshll.u32 [#allocation8], 4
      %s262 = int_to_ptr.vmem [resolvable:$true] %s261
      %s263 = sshll.u32 %s3, 4
      %s264 = int_to_ptr.hbm [resolvable:$true] %s263
      %269 = dma.vmem_to_hbm [thread:$0]  %s262, 512, %s264, [#allocation4], 256, 256, 16
    $region29: #{tpu_custom_call.1} parent=1 // pred_fallthru
      _
    // Predicated region
    $region30: #{tpu_custom_call.1} parent=1 // pred_check
      _
    $region31: #{tpu_custom_call.1} parent=1 // pred_check_branch
      %271 = sbr.rel (0) target = $region33
    $region32: #{tpu_custom_call.1} parent=1 // pred_region
      %273 = dma.done [#allocation4], 512
    $region33: #{tpu_custom_call.1} parent=1 // pred_fallthru
      _
    %274 = vsyncpa [#allocation3], 1
    %275 = vsyncpa [#allocation6], 1
    %276 = vsyncpa [#allocation4], 1

</llo_original>
